<compile_context>
chip_gen: v7x
topology: tpu7x:2x2x1
jax: 0.10.0
libtpu: 0.0.40
codegen_flags: <defaults>
</compile_context>

<pallas_src>
import functools

import numpy as np
import jax
import jax.numpy as jnp
from jax.experimental import pallas as pl
from jax.experimental.pallas import tpu as pltpu

IGNORE_INDEX = 255
LANE = 128
DEFAULT_TILE_M = 512    # rows per grid step for M-tiled kernels (multiple of 8)
DEFAULT_TILE_WC = 512   # lane-dense streaming tile for the resize height pass (multiple of 128)
DEFAULT_TILE_B = 8      # (w, Cpad) row-slabs per grid step for the width pass / fused CE


def _round_up(x, m):
    return (x + m - 1) // m * m


def _parallel(n_axes):
    return pltpu.CompilerParams(dimension_semantics=("parallel",) * n_axes)


# ----------------------------- Pallas kernels ------------------------------

def _linear_bias_kernel(x_ref, w_ref, b_ref, o_ref):
    # bf16 MXU operands (fast path on v6e/v7x, legal on v5e), fp32 accumulate + epilogue.
    acc = jnp.dot(x_ref[...].astype(jnp.bfloat16),
                  w_ref[...].astype(jnp.bfloat16),
                  preferred_element_type=jnp.float32)
    o_ref[...] = (acc + b_ref[...]).astype(o_ref.dtype)


def _resize_h_kernel(a_ref, x_ref, o_ref):
    # (Hout, h) @ (h, TILE_WC) -> (Hout, TILE_WC); A stays resident, x streams lane-dense.
    o_ref[0] = jnp.dot(a_ref[...], x_ref[0],
                       preferred_element_type=jnp.float32).astype(o_ref.dtype)


def _resize_w_kernel(a_ref, x_ref, o_ref):
    # Inference path. For each row-slab t: (Wout, w) @ (w, Cpad) -> (Wout, Cpad).
    a = a_ref[...]
    for t in range(x_ref.shape[0]):            # small static unroll (tile_b row-slabs)
        o_ref[t] = jnp.dot(a, x_ref[t],
                           preferred_element_type=jnp.float32).astype(o_ref.dtype)


def _resize_w_ce_kernel(a_ref, x_ref, lbl_ref, probs_ref, nll_ref, valid_ref, *, num_classes):
    # Training path: fused width-resize + softmax + cross-entropy per row-slab.
    # Resized logits never hit HBM; only probs / per-pixel nll / valid are written.
    a = a_ref[...]                                                   # (Wout, w) resident
    wout = a_ref.shape[0]
    cp = x_ref.shape[2]
    cls = jax.lax.broadcasted_iota(jnp.int32, (wout, cp), 1)         # hoisted out of loop
    lane_ok = cls < num_classes
    for t in range(x_ref.shape[0]):                                  # small static unroll
        logits = jnp.dot(a, x_ref[t], preferred_element_type=jnp.float32)   # (Wout, Cp)
        # Mask padded class lanes (finite large-negative avoids inf*0 hazards).
        logits = jnp.where(lane_ok, logits, jnp.float32(-1e30))
        m = jnp.max(logits, axis=-1, keepdims=True)
        e = jnp.exp(logits - m)                                      # EUP
        s = jnp.sum(e, axis=-1, keepdims=True)                       # XLU
        probs_ref[t] = (e / s).astype(probs_ref.dtype)
        lbl = lbl_ref[t]                                             # (Wout, 1) int32
        tgt = jnp.sum(jnp.where(cls == lbl, logits, 0.0), axis=-1, keepdims=True)
        valid = (lbl != IGNORE_INDEX).astype(jnp.float32)
        nll_ref[t] = (m + jnp.log(s) - tgt) * valid                  # 0 where ignored
        valid_ref[t] = valid


# ----------------------------- Pallas wrappers ------------------------------

def pallas_linear_1x1(x, w, b, *, tile_m=DEFAULT_TILE_M):
    """1x1 conv as (M,K)@(K,C)+b with the M axis tiled on a parallel grid."""
    M, K = x.shape
    K2, C = w.shape
    assert K == K2
    b2 = b.reshape(1, C)
    tm = M if M <= tile_m else tile_m
    grid = (pl.cdiv(M, tm),)
    cost = pl.CostEstimate(flops=2 * M * K * C, transcendentals=0,
                           bytes_accessed=4 * (M * K + K * C + C + M * C))
    return pl.pallas_call(
        _linear_bias_kernel,
        out_shape=jax.ShapeDtypeStruct((M, C), jnp.float32),
        grid=grid,
        in_specs=[
            pl.BlockSpec((tm, K), lambda i: (i, 0)),   # streamed, double-buffered
            pl.BlockSpec((K, C), lambda i: (0, 0)),    # resident weights
            pl.BlockSpec((1, C), lambda i: (0, 0)),    # resident bias
        ],
        out_specs=pl.BlockSpec((tm, C), lambda i: (i, 0)),
        compiler_params=_parallel(1),
        cost_estimate=cost,
    )(x, w, b2)


def pallas_resize_h(a_h, x, *, tile_wc=DEFAULT_TILE_WC):
    """Height pass: x (N, h, WC) -> (N, Hout, WC), WC = w*Cpad is the lane-dense axis."""
    N, h, WC = x.shape
    Hout = a_h.shape[0]
    twc = WC if WC <= tile_wc else tile_wc
    grid = (N, pl.cdiv(WC, twc))
    cost = pl.CostEstimate(flops=2 * N * Hout * h * WC, transcendentals=0,
                           bytes_accessed=4 * (N * h * WC + Hout * h + N * Hout * WC))
    return pl.pallas_call(
        _resize_h_kernel,
        out_shape=jax.ShapeDtypeStruct((N, Hout, WC), jnp.float32),
        grid=grid,
        in_specs=[
            pl.BlockSpec((Hout, h), lambda n, j: (0, 0)),        # resident interp matrix
            pl.BlockSpec((1, h, twc), lambda n, j: (n, 0, j)),
        ],
        out_specs=pl.BlockSpec((1, Hout, twc), lambda n, j: (n, 0, j)),
        compiler_params=_parallel(2),
        cost_estimate=cost,
    )(a_h, x)


def pallas_resize_w(a_w, x, *, tile_b=DEFAULT_TILE_B):
    """Width pass (inference): x (B, w, Cpad) -> (B, Wout, Cpad), B = N*Hout tiled."""
    B, w, Cp = x.shape
    Wout = a_w.shape[0]
    tb = B if B <= tile_b else tile_b
    grid = (pl.cdiv(B, tb),)
    cost = pl.CostEstimate(flops=2 * B * Wout * w * Cp, transcendentals=0,
                           bytes_accessed=4 * (B * w * Cp + Wout * w + B * Wout * Cp))
    return pl.pallas_call(
        _resize_w_kernel,
        out_shape=jax.ShapeDtypeStruct((B, Wout, Cp), jnp.float32),
        grid=grid,
        in_specs=[
            pl.BlockSpec((Wout, w), lambda i: (0, 0)),           # resident interp matrix
            pl.BlockSpec((tb, w, Cp), lambda i: (i, 0, 0)),
        ],
        out_specs=pl.BlockSpec((tb, Wout, Cp), lambda i: (i, 0, 0)),
        compiler_params=_parallel(1),
        cost_estimate=cost,
    )(a_w, x)


def pallas_resize_w_ce(a_w, x, labels, num_classes, *, tile_b=DEFAULT_TILE_B):
    """Training path: fused width-resize + softmax + cross_entropy2d.

    x: (B, w, Cpad) with B = N*Hout; labels: (B, Wout, 1) int32.
    Returns (mean loss over non-ignored pixels, probs (B, Wout, Cpad)).
    """
    B, w, Cp = x.shape
    Wout = a_w.shape[0]
    tb = B if B <= tile_b else tile_b
    grid = (pl.cdiv(B, tb),)
    cost = pl.CostEstimate(
        flops=2 * B * Wout * w * Cp + 8 * B * Wout * Cp,
        transcendentals=B * Wout * (Cp + 1),
        bytes_accessed=4 * (B * w * Cp + Wout * w + 2 * B * Wout * Cp + 3 * B * Wout))
    probs, nll, valid = pl.pallas_call(
        functools.partial(_resize_w_ce_kernel, num_classes=num_classes),
        out_shape=(
            jax.ShapeDtypeStruct((B, Wout, Cp), jnp.float32),
            jax.ShapeDtypeStruct((B, Wout, 1), jnp.float32),
            jax.ShapeDtypeStruct((B, Wout, 1), jnp.float32),
        ),
        grid=grid,
        in_specs=[
            pl.BlockSpec((Wout, w), lambda i: (0, 0)),           # resident interp matrix
            pl.BlockSpec((tb, w, Cp), lambda i: (i, 0, 0)),
            pl.BlockSpec((tb, Wout, 1), lambda i: (i, 0, 0)),
        ],
        out_specs=(
            pl.BlockSpec((tb, Wout, Cp), lambda i: (i, 0, 0)),
            pl.BlockSpec((tb, Wout, 1), lambda i: (i, 0, 0)),
            pl.BlockSpec((tb, Wout, 1), lambda i: (i, 0, 0)),
        ),
        compiler_params=_parallel(1),
        cost_estimate=cost,
    )(a_w, x, labels)
    loss = jnp.sum(nll) / jnp.maximum(jnp.sum(valid), 1.0)
    return loss, probs


# ----------------------------- bilinear matrices ----------------------------

def _bilinear_matrix(out_size, in_size):
    """Interpolation matrix matching F.interpolate(mode='bilinear', align_corners=False)."""
    A = np.zeros((out_size, in_size), dtype=np.float32)
    if out_size == in_size:
        np.fill_diagonal(A, 1.0)
        return A
    scale = in_size / out_size
    dst = np.arange(out_size, dtype=np.float64)
    src = np.clip((dst + 0.5) * scale - 0.5, 0.0, in_size - 1)
    lo = np.floor(src).astype(np.int64)
    hi = np.minimum(lo + 1, in_size - 1)
    frac = (src - lo).astype(np.float32)
    A[np.arange(out_size), lo] += (1.0 - frac)
    A[np.arange(out_size), hi] += frac
    return A


# ----------------------------- LinearProbe (JAX) ----------------------------

class LinearProbeJAX:
    """Mirror of network/probe.py::LinearProbe. Inputs/outputs use NCHW like PyTorch."""

    def __init__(self, net_fn, dim, num_classes, key, semantic_feature_position=-1):
        self.net = net_fn
        self.semantic_feature_position = semantic_feature_position
        self.num_classes = num_classes
        self.c_pad = _round_up(num_classes, LANE)
        # nn.Conv2d(dim, num_classes, 1, 1) default init: U(-1/sqrt(dim), 1/sqrt(dim))
        bound = 1.0 / float(np.sqrt(dim))
        kw, kb = jax.random.split(key)
        w = jax.random.uniform(kw, (dim, num_classes), jnp.float32, -bound, bound)
        b = jax.random.uniform(kb, (num_classes,), jnp.float32, -bound, bound)
        # Lane-dense padded class dim; padded columns produce logits==0 which are masked
        # to -1e30 inside the softmax/CE kernels and sliced off at the output boundary.
        self.w_pad = jnp.pad(w, ((0, 0), (0, self.c_pad - num_classes)))
        self.b_pad = jnp.pad(b, ((0, self.c_pad - num_classes),))
        self._resize_cache = {}   # (h, w, H, W) -> (A_h, A_w) device arrays (hoisted/cached)

    def _resize_mats(self, h, w, H, W):
        key = (h, w, H, W)
        if key not in self._resize_cache:
            self._resize_cache[key] = (jnp.asarray(_bilinear_matrix(H, h)),
                                       jnp.asarray(_bilinear_matrix(W, w)))
        return self._resize_cache[key]

    def __call__(self, image_nchw, label=None):
        code = self.net(image_nchw)
        if self.semantic_feature_position >= 0:
            semantic_code = code[self.semantic_feature_position]
        else:
            semantic_code = code
        # NCHW -> NHWC only on the small pre-resize feature map.
        sc = jnp.transpose(semantic_code, (0, 2, 3, 1))
        N, h, w, dim = sc.shape
        H, W = image_nchw.shape[2], image_nchw.shape[3]
        Cp = self.c_pad

        # 1x1 conv with lane-padded classes, M-tiled parallel grid.
        logits_pad = pallas_linear_1x1(sc.reshape(N * h * w, dim), self.w_pad, self.b_pad)

        # Bilinear resize, channels-last end-to-end: no full-tensor HBM transposes,
        # only free reshapes between the two interpolation matmuls.
        A_h, A_w = self._resize_mats(h, w, H, W)
        y1 = pallas_resize_h(A_h, logits_pad.reshape(N, h, w * Cp))   # (N, H, w*Cp)
        x_w = y1.reshape(N * H, w, Cp)                                # free reshape

        if label is not None:
            # Fused width-resize + softmax + CE: the resized logits never touch HBM.
            labels = label.reshape(N * H, W, 1).astype(jnp.int32)
            loss, probs_pad = pallas_resize_w_ce(A_w, x_w, labels, self.num_classes)
            probs_nchw = jnp.transpose(
                probs_pad.reshape(N, H, W, Cp)[..., :self.num_classes], (0, 3, 1, 2))
            return loss, probs_nchw, code

        y2 = pallas_resize_w(A_w, x_w)                                # (N*H, W, Cp)
        logits_nchw = jnp.transpose(
            y2.reshape(N, H, W, Cp)[..., :self.num_classes], (0, 3, 1, 2))
        return logits_nchw, code


# ----------------------------- toy backbone (`self.net`) --------------------
# TODO(synk): the real `net` backbone is an arbitrary external module; replaced here by a
# deterministic 2x2 avg-pool + 1x1 projection (projection runs through the Pallas matmul kernel).

def make_toy_net(c_in, dim, key):
    bound = 1.0 / float(np.sqrt(c_in))
    kw, kb = jax.random.split(key)
    w = jax.random.uniform(kw, (c_in, dim), jnp.float32, -bound, bound)
    b = jax.random.uniform(kb, (dim,), jnp.float32, -bound, bound)

    def net(image_nchw):
        x = jnp.transpose(image_nchw, (0, 2, 3, 1))                   # NHWC
        N, H, W, C = x.shape
        x = x.reshape(N, H // 2, 2, W // 2, 2, C).mean(axis=(2, 4))   # 2x downsample
        h, w_ = H // 2, W // 2
        code = pallas_linear_1x1(x.reshape(N * h * w_, C), w, b).reshape(N, h, w_, dim)
        return jnp.transpose(code, (0, 3, 1, 2))                      # NCHW like a torch backbone
    return net


# ----------------------------- main -----------------------------------------

if __name__ == "__main__":
    key = jax.random.PRNGKey(0)
    k_img, k_lbl, k_net, k_probe = jax.random.split(key, 4)

    N, C_in, H, W = 2, 4, 32, 32
    dim, num_classes = 32, 16

    image = jax.random.normal(k_img, (N, C_in, H, W), jnp.float32)
    label = jax.random.randint(k_lbl, (N, H, W), 0, num_classes).astype(jnp.int32)
    label = label.at[0, 0, :4].set(IGNORE_INDEX)   # exercise ignore_index=255

    net = make_toy_net(C_in, dim, k_net)
    probe = LinearProbeJAX(net, dim, num_classes, k_probe)

    loss, probs, code = probe(image, label)        # training branch (fused resize+CE)
    logits, code2 = probe(image)                   # inference branch
    jax.block_until_ready((loss, probs, code, logits, code2))

    # sanity: softmax over the class (channel) dim sums to 1, loss is finite
    assert np.allclose(np.asarray(probs.sum(axis=1)), 1.0, atol=1e-4)
    assert np.isfinite(float(loss))
    assert logits.shape == (N, num_classes, H, W)
    assert probs.shape == (N, num_classes, H, W)

    print("KERNEL_OK")
</pallas_src>

<mosaic_0001>
module attributes {stable_mosaic.version = 11 : i64} {
  func.func @_linear_bias_kernel(%arg0: i32, %arg1: memref<512x4xf32, #tpu.memory_space<vmem>>, %arg2: memref<4x32xf32, #tpu.memory_space<vmem>>, %arg3: memref<1x32xf32, #tpu.memory_space<vmem>>, %arg4: memref<512x32xf32, #tpu.memory_space<vmem>>) attributes {dimension_semantics = [#tpu.dimension_semantics<parallel>], iteration_bounds = array<i64: 1>, scalar_prefetch = 0 : i64, scratch_operands = 0 : i64, tpu.core_type = #tpu.core_type<tc>, window_params = [{transform_indices = @transform_0, window_bounds = array<i64: 512, 4>}, {pipeline_mode = #tpu.pipeline_mode<synchronous>, transform_indices = @transform_1, window_bounds = array<i64: 4, 32>}, {pipeline_mode = #tpu.pipeline_mode<synchronous>, transform_indices = @transform_2, window_bounds = array<i64: 1, 32>}, {transform_indices = @transform_3, window_bounds = array<i64: 512, 32>}]} {
    %c0 = arith.constant 0 : index
    %c0_0 = arith.constant 0 : index
    %0 = vector.load %arg1[%c0, %c0_0] : memref<512x4xf32, #tpu.memory_space<vmem>>, vector<512x4xf32>
    %1 = arith.truncf %0 : vector<512x4xf32> to vector<512x4xbf16>
    %c0_1 = arith.constant 0 : index
    %c0_2 = arith.constant 0 : index
    %2 = vector.load %arg2[%c0_1, %c0_2] : memref<4x32xf32, #tpu.memory_space<vmem>>, vector<4x32xf32>
    %3 = arith.truncf %2 : vector<4x32xf32> to vector<4x32xbf16>
    %cst = arith.constant dense<0.000000e+00> : vector<512x32xf32>
    %4 = tpu.matmul %1, %3, %cst {dimension_numbers = #tpu.dot_dimension_numbers<[1], [0], [0], [1], [0, 0, 1, 1], [], []>} : vector<512x4xbf16>, vector<4x32xbf16>, vector<512x32xf32> -> vector<512x32xf32>
    %c0_3 = arith.constant 0 : index
    %c0_4 = arith.constant 0 : index
    %5 = vector.load %arg3[%c0_3, %c0_4] : memref<1x32xf32, #tpu.memory_space<vmem>>, vector<1x32xf32>
    %6 = vector.broadcast %5 : vector<1x32xf32> to vector<512x32xf32>
    %7 = arith.addf %4, %6 : vector<512x32xf32>
    %c0_5 = arith.constant 0 : index
    %c0_6 = arith.constant 0 : index
    %8 = vector.load %arg4[%c0_5, %c0_6] : memref<512x32xf32, #tpu.memory_space<vmem>>, vector<512x32xf32>
    tpu.vector_store %arg4[%c0_5, %c0_6], %7 {strides = array<i32>} : memref<512x32xf32, #tpu.memory_space<vmem>>, vector<512x32xf32>,
    return
  }
  func.func @transform_0(%arg0: i32) -> (i32, i32) {
    %c0_i32 = arith.constant 0 : i32
    %c0_i32_0 = arith.constant 0 : i32
    return %arg0, %c0_i32 : i32, i32
  }
  func.func @transform_1(%arg0: i32) -> (i32, i32) {
    %c0_i32 = arith.constant 0 : i32
    %c0_i32_0 = arith.constant 0 : i32
    %c0_i32_1 = arith.constant 0 : i32
    return %c0_i32, %c0_i32_0 : i32, i32
  }
  func.func @transform_2(%arg0: i32) -> (i32, i32) {
    %c0_i32 = arith.constant 0 : i32
    %c0_i32_0 = arith.constant 0 : i32
    %c0_i32_1 = arith.constant 0 : i32
    return %c0_i32, %c0_i32_0 : i32, i32
  }
  func.func @transform_3(%arg0: i32) -> (i32, i32) {
    %c0_i32 = arith.constant 0 : i32
    %c0_i32_0 = arith.constant 0 : i32
    return %arg0, %c0_i32 : i32, i32
  }
}

</mosaic_0001>

<llo_original>
// kernel: tpu_custom_call.1
$region0: #{tpu_custom_call.1}
  #allocation0 [shape = 'u32[]', space=smem, size = 0x4, offset = 0x4, fixed_abs, tag = 'smem constant byte address 0x4 - core index']
  #allocation1 [shape = 'u32[144,128]{1,0:T(1,128)}', space=vmem, size = 0x12000, scoped, tag = 'internal scratch']
  %s0 = inlined_call_operand.vmem [shape: f32[512,4], index: 0, kind: input, shape index: {}]
  %s1 = inlined_call_operand.vmem [shape: f32[4,32], index: 1, kind: input, shape index: {}]
  %s2 = inlined_call_operand.vmem [shape: f32[1,32], index: 2, kind: input, shape index: {}]
  %s3 = inlined_call_operand.vmem [shape: f32[512,32], index: 3, kind: output, shape index: {}]
  %s4 = sld [smem:[#allocation0]]
  $region22: #{tpu_custom_call.1} parent=0
    _
  %s6 = ssub.s32 1, %s4
  %s7 = scalar_select 0, %s6, %s4
  // Predicated region
  $region2: #{tpu_custom_call.1} parent=0 // pred_check
    _
  $region3: #{tpu_custom_call.1} parent=0 // pred_check_branch
    %9 = sbr.rel (0) target = $region5
  $region4: #{tpu_custom_call.1} parent=0 // pred_region
    _
  $region5: #{tpu_custom_call.1} parent=0 // pred_fallthru
    _
  // Predicated region
  $region6: #{tpu_custom_call.1} parent=0 // pred_check
    _
  $region7: #{tpu_custom_call.1} parent=0 // pred_check_branch
    %11 = sbr.rel (0) target = $region9
  $region8: #{tpu_custom_call.1} parent=0 // pred_region
    _
  $region9: #{tpu_custom_call.1} parent=0 // pred_fallthru
    _
  // Predicated region
  $region10: #{tpu_custom_call.1} parent=0 // pred_check
    _
  $region11: #{tpu_custom_call.1} parent=0 // pred_check_branch
    %13 = sbr.rel (0) target = $region13
  $region12: #{tpu_custom_call.1} parent=0 // pred_region
    _
  $region13: #{tpu_custom_call.1} parent=0 // pred_fallthru
    _
  %v15 = vld [vmem:[%s0] sm:$0xff]
  %v16 = vld [vmem:[%s0 + $0x8] sm:$0xff]
  %v17 = vld [vmem:[%s0 + $0x10] sm:$0xff]
  %v18 = vld [vmem:[%s0 + $0x18] sm:$0xff]
  %v19 = vld [vmem:[%s0 + $0x20] sm:$0xff]
  %v20 = vld [vmem:[%s0 + $0x28] sm:$0xff]
  %v21 = vld [vmem:[%s0 + $0x30] sm:$0xff]
  %v22 = vld [vmem:[%s0 + $0x38] sm:$0xff]
  %v23 = vld [vmem:[%s0 + $0x40] sm:$0xff]
  %v24 = vld [vmem:[%s0 + $0x48] sm:$0xff]
  %v25 = vld [vmem:[%s0 + $0x50] sm:$0xff]
  %v26 = vld [vmem:[%s0 + $0x58] sm:$0xff]
  %v27 = vld [vmem:[%s0 + $0x60] sm:$0xff]
  %v28 = vld [vmem:[%s0 + $0x68] sm:$0xff]
  %v29 = vld [vmem:[%s0 + $0x70] sm:$0xff]
  %v30 = vld [vmem:[%s0 + $0x78] sm:$0xff]
  %v31 = vld [vmem:[%s0 + $0x80] sm:$0xff]
  %v32 = vld [vmem:[%s0 + $0x88] sm:$0xff]
  %v33 = vld [vmem:[%s0 + $0x90] sm:$0xff]
  %v34 = vld [vmem:[%s0 + $0x98] sm:$0xff]
  %v35 = vld [vmem:[%s0 + $0xa0] sm:$0xff]
  %v36 = vld [vmem:[%s0 + $0xa8] sm:$0xff]
  %v37 = vld [vmem:[%s0 + $0xb0] sm:$0xff]
  %v38 = vld [vmem:[%s0 + $0xb8] sm:$0xff]
  %v39 = vld [vmem:[%s0 + $0xc0] sm:$0xff]
  %v40 = vld [vmem:[%s0 + $0xc8] sm:$0xff]
  %v41 = vld [vmem:[%s0 + $0xd0] sm:$0xff]
  %v42 = vld [vmem:[%s0 + $0xd8] sm:$0xff]
  %v43 = vld [vmem:[%s0 + $0xe0] sm:$0xff]
  %v44 = vld [vmem:[%s0 + $0xe8] sm:$0xff]
  %v45 = vld [vmem:[%s0 + $0xf0] sm:$0xff]
  %v46 = vld [vmem:[%s0 + $0xf8] sm:$0xff]
  %v47 = vld [vmem:[%s0 + $0x100] sm:$0xff]
  %v48 = vld [vmem:[%s0 + $0x108] sm:$0xff]
  %v49 = vld [vmem:[%s0 + $0x110] sm:$0xff]
  %v50 = vld [vmem:[%s0 + $0x118] sm:$0xff]
  %v51 = vld [vmem:[%s0 + $0x120] sm:$0xff]
  %v52 = vld [vmem:[%s0 + $0x128] sm:$0xff]
  %v53 = vld [vmem:[%s0 + $0x130] sm:$0xff]
  %v54 = vld [vmem:[%s0 + $0x138] sm:$0xff]
  %v55 = vld [vmem:[%s0 + $0x140] sm:$0xff]
  %v56 = vld [vmem:[%s0 + $0x148] sm:$0xff]
  %v57 = vld [vmem:[%s0 + $0x150] sm:$0xff]
  %v58 = vld [vmem:[%s0 + $0x158] sm:$0xff]
  %v59 = vld [vmem:[%s0 + $0x160] sm:$0xff]
  %v60 = vld [vmem:[%s0 + $0x168] sm:$0xff]
  %v61 = vld [vmem:[%s0 + $0x170] sm:$0xff]
  %v62 = vld [vmem:[%s0 + $0x178] sm:$0xff]
  %v63 = vld [vmem:[%s0 + $0x180] sm:$0xff]
  %v64 = vld [vmem:[%s0 + $0x188] sm:$0xff]
  %v65 = vld [vmem:[%s0 + $0x190] sm:$0xff]
  %v66 = vld [vmem:[%s0 + $0x198] sm:$0xff]
  %v67 = vld [vmem:[%s0 + $0x1a0] sm:$0xff]
  %v68 = vld [vmem:[%s0 + $0x1a8] sm:$0xff]
  %v69 = vld [vmem:[%s0 + $0x1b0] sm:$0xff]
  %v70 = vld [vmem:[%s0 + $0x1b8] sm:$0xff]
  %v71 = vld [vmem:[%s0 + $0x1c0] sm:$0xff]
  %v72 = vld [vmem:[%s0 + $0x1c8] sm:$0xff]
  %v73 = vld [vmem:[%s0 + $0x1d0] sm:$0xff]
  %v74 = vld [vmem:[%s0 + $0x1d8] sm:$0xff]
  %v75 = vld [vmem:[%s0 + $0x1e0] sm:$0xff]
  %v76 = vld [vmem:[%s0 + $0x1e8] sm:$0xff]
  %v77 = vld [vmem:[%s0 + $0x1f0] sm:$0xff]
  %v78 = vld [vmem:[%s0 + $0x1f8] sm:$0xff]
  %v79 = vpack.c.bf16 %v16, %v15
  %v80 = vpack.c.bf16 %v18, %v17
  %v81 = vpack.c.bf16 %v20, %v19
  %v82 = vpack.c.bf16 %v22, %v21
  %v83 = vpack.c.bf16 %v24, %v23
  %v84 = vpack.c.bf16 %v26, %v25
  %v85 = vpack.c.bf16 %v28, %v27
  %v86 = vpack.c.bf16 %v30, %v29
  %v87 = vpack.c.bf16 %v32, %v31
  %v88 = vpack.c.bf16 %v34, %v33
  %v89 = vpack.c.bf16 %v36, %v35
  %v90 = vpack.c.bf16 %v38, %v37
  %v91 = vpack.c.bf16 %v40, %v39
  %v92 = vpack.c.bf16 %v42, %v41
  %v93 = vpack.c.bf16 %v44, %v43
  %v94 = vpack.c.bf16 %v46, %v45
  %v95 = vpack.c.bf16 %v48, %v47
  %v96 = vpack.c.bf16 %v50, %v49
  %v97 = vpack.c.bf16 %v52, %v51
  %v98 = vpack.c.bf16 %v54, %v53
  %v99 = vpack.c.bf16 %v56, %v55
  %v100 = vpack.c.bf16 %v58, %v57
  %v101 = vpack.c.bf16 %v60, %v59
  %v102 = vpack.c.bf16 %v62, %v61
  %v103 = vpack.c.bf16 %v64, %v63
  %v104 = vpack.c.bf16 %v66, %v65
  %v105 = vpack.c.bf16 %v68, %v67
  %v106 = vpack.c.bf16 %v70, %v69
  %v107 = vpack.c.bf16 %v72, %v71
  %v108 = vpack.c.bf16 %v74, %v73
  %v109 = vpack.c.bf16 %v76, %v75
  %v110 = vpack.c.bf16 %v78, %v77
  %v111 = vld [vmem:[%s1] sm:$0xf]
  %v112 = vpack.c.bf16 %v111, %v111
  %v113 = vld [vmem:[%s2] sm:$0x1]
  %v115 = vlaneseq
  %v116 = vshrl.u32 %v115, 7
  %v117 = vsub.s32 0, %v116
  %v118 = vrot.slane %v113, %v117
  %vm120 = vcmask 31744
  %v122 = vsel %vm120, %v79, 0
  %v125 = vsel %vm120, %v80, 0
  %v128 = vsel %vm120, %v81, 0
  %v131 = vsel %vm120, %v82, 0
  %v134 = vsel %vm120, %v83, 0
  %v137 = vsel %vm120, %v84, 0
  %v140 = vsel %vm120, %v85, 0
  %v143 = vsel %vm120, %v86, 0
  %v146 = vsel %vm120, %v87, 0
  %v149 = vsel %vm120, %v88, 0
  %v152 = vsel %vm120, %v89, 0
  %v155 = vsel %vm120, %v90, 0
  %v158 = vsel %vm120, %v91, 0
  %v161 = vsel %vm120, %v92, 0
  %v164 = vsel %vm120, %v93, 0
  %v167 = vsel %vm120, %v94, 0
  %v170 = vsel %vm120, %v95, 0
  %v173 = vsel %vm120, %v96, 0
  %v176 = vsel %vm120, %v97, 0
  %v179 = vsel %vm120, %v98, 0
  %v182 = vsel %vm120, %v99, 0
  %v185 = vsel %vm120, %v100, 0
  %v188 = vsel %vm120, %v101, 0
  %v191 = vsel %vm120, %v102, 0
  %v194 = vsel %vm120, %v103, 0
  %v197 = vsel %vm120, %v104, 0
  %v200 = vsel %vm120, %v105, 0
  %v203 = vsel %vm120, %v106, 0
  %v206 = vsel %vm120, %v107, 0
  %v209 = vsel %vm120, %v108, 0
  %v212 = vsel %vm120, %v109, 0
  %v215 = vsel %vm120, %v110, 0
  %vm217 = vcmask 1041408
  %v219 = vsel %vm217, %v112, 0
  %221 = vmatprep.subr.bf16.mxu0 0
  %222 = vmatpush1.bf16.msra.mxu0 %v219
  %223 = vmatprep.subr.bf16.mxu0 0
  %224 = vmatpush1.bf16.msra.mxu0 0
  %225 = vmatprep.subr.bf16.mxu0 0
  %226 = vmatpush1.bf16.msra.mxu0 0
  %227 = vmatprep.subr.bf16.mxu0 0
  %228 = vmatpush1.bf16.msra.mxu0 0
  %229 = vmatprep.subr.bf16.mxu0 0
  %230 = vmatpush1.bf16.msra.mxu0 0
  %231 = vmatprep.subr.bf16.mxu0 0
  %232 = vmatpush1.bf16.msra.mxu0 0
  %233 = vmatprep.subr.bf16.mxu0 0
  %234 = vmatpush1.bf16.msra.mxu0 0
  %235 = vmatprep.subr.bf16.mxu0 0
  %236 = vmatpush1.bf16.msra.mxu0 0
  %237 = vmatprep.subr.bf16.mxu0 0
  %238 = vmatpush1.bf16.msra.mxu0 0
  %239 = vmatprep.subr.bf16.mxu0 0
  %240 = vmatpush1.bf16.msra.mxu0 0
  %241 = vmatprep.subr.bf16.mxu0 0
  %242 = vmatpush1.bf16.msra.mxu0 0
  %243 = vmatprep.subr.bf16.mxu0 0
  %244 = vmatpush1.bf16.msra.mxu0 0
  %245 = vmatprep.subr.bf16.mxu0 0
  %246 = vmatpush1.bf16.msra.mxu0 0
  %247 = vmatprep.subr.bf16.mxu0 0
  %248 = vmatpush1.bf16.msra.mxu0 0
  %249 = vmatprep.subr.bf16.mxu0 0
  %250 = vmatpush1.bf16.msra.mxu0 0
  %251 = vmatprep.subr.bf16.mxu0 0
  %252 = vmatpush1.bf16.msra.mxu0 0
  %253 = vmatprep.mubr.bf16.mxu0 0
  %254 = vmatmul.mubr.bf16.gmra.mrb[0].mxu0 %v122
  %v255 = vpop.f32.mrb[0].mxu0
  %v256 = vadd.f32 %v118, %v255
  %v257 = vpop.f32.mrb[0].mxu0
  %v258 = vpop.f32.mrb[0].mxu0
  %v259 = vadd.f32 %v118, %v258
  %v260 = vpop.f32.mrb[0].mxu0
  %261 = vmatprep.mubr.bf16.mxu0 0
  %262 = vmatmul.mubr.bf16.gmra.mrb[0].mxu0 %v125
  %v263 = vpop.f32.mrb[0].mxu0
  %v264 = vadd.f32 %v118, %v263
  %v265 = vpop.f32.mrb[0].mxu0
  %v266 = vpop.f32.mrb[0].mxu0
  %v267 = vadd.f32 %v118, %v266
  %v268 = vpop.f32.mrb[0].mxu0
  %269 = vmatprep.mubr.bf16.mxu0 0
  %270 = vmatmul.mubr.bf16.gmra.mrb[0].mxu0 %v128
  %v271 = vpop.f32.mrb[0].mxu0
  %v272 = vadd.f32 %v118, %v271
  %v273 = vpop.f32.mrb[0].mxu0
  %v274 = vpop.f32.mrb[0].mxu0
  %v275 = vadd.f32 %v118, %v274
  %v276 = vpop.f32.mrb[0].mxu0
  %277 = vmatprep.mubr.bf16.mxu0 0
  %278 = vmatmul.mubr.bf16.gmra.mrb[0].mxu0 %v131
  %v279 = vpop.f32.mrb[0].mxu0
  %v280 = vadd.f32 %v118, %v279
  %v281 = vpop.f32.mrb[0].mxu0
  %v282 = vpop.f32.mrb[0].mxu0
  %v283 = vadd.f32 %v118, %v282
  %v284 = vpop.f32.mrb[0].mxu0
  %285 = vmatprep.mubr.bf16.mxu0 0
  %286 = vmatmul.mubr.bf16.gmra.mrb[0].mxu0 %v134
  %v287 = vpop.f32.mrb[0].mxu0
  %v288 = vadd.f32 %v118, %v287
  %v289 = vpop.f32.mrb[0].mxu0
  %v290 = vpop.f32.mrb[0].mxu0
  %v291 = vadd.f32 %v118, %v290
  %v292 = vpop.f32.mrb[0].mxu0
  %293 = vmatprep.mubr.bf16.mxu0 0
  %294 = vmatmul.mubr.bf16.gmra.mrb[0].mxu0 %v137
  %v295 = vpop.f32.mrb[0].mxu0
  %v296 = vadd.f32 %v118, %v295
  %v297 = vpop.f32.mrb[0].mxu0
  %v298 = vpop.f32.mrb[0].mxu0
  %v299 = vadd.f32 %v118, %v298
  %v300 = vpop.f32.mrb[0].mxu0
  %301 = vmatprep.mubr.bf16.mxu0 0
  %302 = vmatmul.mubr.bf16.gmra.mrb[0].mxu0 %v140
  %v303 = vpop.f32.mrb[0].mxu0
  %v304 = vadd.f32 %v118, %v303
  %v305 = vpop.f32.mrb[0].mxu0
  %v306 = vpop.f32.mrb[0].mxu0
  %v307 = vadd.f32 %v118, %v306
  %v308 = vpop.f32.mrb[0].mxu0
  %309 = vmatprep.mubr.bf16.mxu0 0
  %310 = vmatmul.mubr.bf16.gmra.mrb[0].mxu0 %v143
  %v311 = vpop.f32.mrb[0].mxu0
  %v312 = vadd.f32 %v118, %v311
  %v313 = vpop.f32.mrb[0].mxu0
  %v314 = vpop.f32.mrb[0].mxu0
  %v315 = vadd.f32 %v118, %v314
  %v316 = vpop.f32.mrb[0].mxu0
  %317 = vmatprep.mubr.bf16.mxu0 0
  %318 = vmatmul.mubr.bf16.gmra.mrb[0].mxu0 %v146
  %v319 = vpop.f32.mrb[0].mxu0
  %v320 = vadd.f32 %v118, %v319
  %v321 = vpop.f32.mrb[0].mxu0
  %v322 = vpop.f32.mrb[0].mxu0
  %v323 = vadd.f32 %v118, %v322
  %v324 = vpop.f32.mrb[0].mxu0
  %325 = vmatprep.mubr.bf16.mxu0 0
  %326 = vmatmul.mubr.bf16.gmra.mrb[0].mxu0 %v149
  %v327 = vpop.f32.mrb[0].mxu0
  %v328 = vadd.f32 %v118, %v327
  %v329 = vpop.f32.mrb[0].mxu0
  %v330 = vpop.f32.mrb[0].mxu0
  %v331 = vadd.f32 %v118, %v330
  %v332 = vpop.f32.mrb[0].mxu0
  %333 = vmatprep.mubr.bf16.mxu0 0
  %334 = vmatmul.mubr.bf16.gmra.mrb[0].mxu0 %v152
  %v335 = vpop.f32.mrb[0].mxu0
  %v336 = vadd.f32 %v118, %v335
  %v337 = vpop.f32.mrb[0].mxu0
  %v338 = vpop.f32.mrb[0].mxu0
  %v339 = vadd.f32 %v118, %v338
  %v340 = vpop.f32.mrb[0].mxu0
  %341 = vmatprep.mubr.bf16.mxu0 0
  %342 = vmatmul.mubr.bf16.gmra.mrb[0].mxu0 %v155
  %v343 = vpop.f32.mrb[0].mxu0
  %v344 = vadd.f32 %v118, %v343
  %v345 = vpop.f32.mrb[0].mxu0
  %v346 = vpop.f32.mrb[0].mxu0
  %v347 = vadd.f32 %v118, %v346
  %v348 = vpop.f32.mrb[0].mxu0
  %349 = vmatprep.mubr.bf16.mxu0 0
  %350 = vmatmul.mubr.bf16.gmra.mrb[0].mxu0 %v158
  %v351 = vpop.f32.mrb[0].mxu0
  %v352 = vadd.f32 %v118, %v351
  %v353 = vpop.f32.mrb[0].mxu0
  %v354 = vpop.f32.mrb[0].mxu0
  %v355 = vadd.f32 %v118, %v354
  %v356 = vpop.f32.mrb[0].mxu0
  %357 = vmatprep.mubr.bf16.mxu0 0
  %358 = vmatmul.mubr.bf16.gmra.mrb[0].mxu0 %v161
  %v359 = vpop.f32.mrb[0].mxu0
  %v360 = vadd.f32 %v118, %v359
  %v361 = vpop.f32.mrb[0].mxu0
  %v362 = vpop.f32.mrb[0].mxu0
  %v363 = vadd.f32 %v118, %v362
  %v364 = vpop.f32.mrb[0].mxu0
  %365 = vmatprep.mubr.bf16.mxu0 0
  %366 = vmatmul.mubr.bf16.gmra.mrb[0].mxu0 %v164
  %v367 = vpop.f32.mrb[0].mxu0
  %v368 = vadd.f32 %v118, %v367
  %v369 = vpop.f32.mrb[0].mxu0
  %v370 = vpop.f32.mrb[0].mxu0
  %v371 = vadd.f32 %v118, %v370
  %v372 = vpop.f32.mrb[0].mxu0
  %373 = vmatprep.mubr.bf16.mxu0 0
  %374 = vmatmul.mubr.bf16.gmra.mrb[0].mxu0 %v167
  %v375 = vpop.f32.mrb[0].mxu0
  %v376 = vadd.f32 %v118, %v375
  %v377 = vpop.f32.mrb[0].mxu0
  %v378 = vpop.f32.mrb[0].mxu0
  %v379 = vadd.f32 %v118, %v378
  %v380 = vpop.f32.mrb[0].mxu0
  %381 = vmatprep.mubr.bf16.mxu0 0
  %382 = vmatmul.mubr.bf16.gmra.mrb[0].mxu0 %v170
  %v383 = vpop.f32.mrb[0].mxu0
  %v384 = vadd.f32 %v118, %v383
  %v385 = vpop.f32.mrb[0].mxu0
  %v386 = vpop.f32.mrb[0].mxu0
  %v387 = vadd.f32 %v118, %v386
  %v388 = vpop.f32.mrb[0].mxu0
  %389 = vmatprep.mubr.bf16.mxu0 0
  %390 = vmatmul.mubr.bf16.gmra.mrb[0].mxu0 %v173
  %v391 = vpop.f32.mrb[0].mxu0
  %v392 = vadd.f32 %v118, %v391
  %v393 = vpop.f32.mrb[0].mxu0
  %v394 = vpop.f32.mrb[0].mxu0
  %v395 = vadd.f32 %v118, %v394
  %v396 = vpop.f32.mrb[0].mxu0
  %397 = vmatprep.mubr.bf16.mxu0 0
  %398 = vmatmul.mubr.bf16.gmra.mrb[0].mxu0 %v176
  %v399 = vpop.f32.mrb[0].mxu0
  %v400 = vadd.f32 %v118, %v399
  %v401 = vpop.f32.mrb[0].mxu0
  %v402 = vpop.f32.mrb[0].mxu0
  %v403 = vadd.f32 %v118, %v402
  %v404 = vpop.f32.mrb[0].mxu0
  %405 = vmatprep.mubr.bf16.mxu0 0
  %406 = vmatmul.mubr.bf16.gmra.mrb[0].mxu0 %v179
  %v407 = vpop.f32.mrb[0].mxu0
  %v408 = vadd.f32 %v118, %v407
  %v409 = vpop.f32.mrb[0].mxu0
  %v410 = vpop.f32.mrb[0].mxu0
  %v411 = vadd.f32 %v118, %v410
  %v412 = vpop.f32.mrb[0].mxu0
  %413 = vmatprep.mubr.bf16.mxu0 0
  %414 = vmatmul.mubr.bf16.gmra.mrb[0].mxu0 %v182
  %v415 = vpop.f32.mrb[0].mxu0
  %v416 = vadd.f32 %v118, %v415
  %v417 = vpop.f32.mrb[0].mxu0
  %v418 = vpop.f32.mrb[0].mxu0
  %v419 = vadd.f32 %v118, %v418
  %v420 = vpop.f32.mrb[0].mxu0
  %421 = vmatprep.mubr.bf16.mxu0 0
  %422 = vmatmul.mubr.bf16.gmra.mrb[0].mxu0 %v185
  %v423 = vpop.f32.mrb[0].mxu0
  %v424 = vadd.f32 %v118, %v423
  %v425 = vpop.f32.mrb[0].mxu0
  %v426 = vpop.f32.mrb[0].mxu0
  %v427 = vadd.f32 %v118, %v426
  %v428 = vpop.f32.mrb[0].mxu0
  %429 = vmatprep.mubr.bf16.mxu0 0
  %430 = vmatmul.mubr.bf16.gmra.mrb[0].mxu0 %v188
  %v431 = vpop.f32.mrb[0].mxu0
  %v432 = vadd.f32 %v118, %v431
  %v433 = vpop.f32.mrb[0].mxu0
  %v434 = vpop.f32.mrb[0].mxu0
  %v435 = vadd.f32 %v118, %v434
  %v436 = vpop.f32.mrb[0].mxu0
  %437 = vmatprep.mubr.bf16.mxu0 0
  %438 = vmatmul.mubr.bf16.gmra.mrb[0].mxu0 %v191
  %v439 = vpop.f32.mrb[0].mxu0
  %v440 = vadd.f32 %v118, %v439
  %v441 = vpop.f32.mrb[0].mxu0
  %v442 = vpop.f32.mrb[0].mxu0
  %v443 = vadd.f32 %v118, %v442
  %v444 = vpop.f32.mrb[0].mxu0
  %445 = vmatprep.mubr.bf16.mxu0 0
  %446 = vmatmul.mubr.bf16.gmra.mrb[0].mxu0 %v194
  %v447 = vpop.f32.mrb[0].mxu0
  %v448 = vadd.f32 %v118, %v447
  %v449 = vpop.f32.mrb[0].mxu0
  %v450 = vpop.f32.mrb[0].mxu0
  %v451 = vadd.f32 %v118, %v450
  %v452 = vpop.f32.mrb[0].mxu0
  %453 = vmatprep.mubr.bf16.mxu0 0
  %454 = vmatmul.mubr.bf16.gmra.mrb[0].mxu0 %v197
  %v455 = vpop.f32.mrb[0].mxu0
  %v456 = vadd.f32 %v118, %v455
  %v457 = vpop.f32.mrb[0].mxu0
  %v458 = vpop.f32.mrb[0].mxu0
  %v459 = vadd.f32 %v118, %v458
  %v460 = vpop.f32.mrb[0].mxu0
  %461 = vmatprep.mubr.bf16.mxu0 0
  %462 = vmatmul.mubr.bf16.gmra.mrb[0].mxu0 %v200
  %v463 = vpop.f32.mrb[0].mxu0
  %v464 = vadd.f32 %v118, %v463
  %v465 = vpop.f32.mrb[0].mxu0
  %v466 = vpop.f32.mrb[0].mxu0
  %v467 = vadd.f32 %v118, %v466
  %v468 = vpop.f32.mrb[0].mxu0
  %469 = vmatprep.mubr.bf16.mxu0 0
  %470 = vmatmul.mubr.bf16.gmra.mrb[0].mxu0 %v203
  %v471 = vpop.f32.mrb[0].mxu0
  %v472 = vadd.f32 %v118, %v471
  %v473 = vpop.f32.mrb[0].mxu0
  %v474 = vpop.f32.mrb[0].mxu0
  %v475 = vadd.f32 %v118, %v474
  %v476 = vpop.f32.mrb[0].mxu0
  %477 = vmatprep.mubr.bf16.mxu0 0
  %478 = vmatmul.mubr.bf16.gmra.mrb[0].mxu0 %v206
  %v479 = vpop.f32.mrb[0].mxu0
  %v480 = vadd.f32 %v118, %v479
  %v481 = vpop.f32.mrb[0].mxu0
  %v482 = vpop.f32.mrb[0].mxu0
  %v483 = vadd.f32 %v118, %v482
  %v484 = vpop.f32.mrb[0].mxu0
  %485 = vmatprep.mubr.bf16.mxu0 0
  %486 = vmatmul.mubr.bf16.gmra.mrb[0].mxu0 %v209
  %v487 = vpop.f32.mrb[0].mxu0
  %v488 = vadd.f32 %v118, %v487
  %v489 = vpop.f32.mrb[0].mxu0
  %v490 = vpop.f32.mrb[0].mxu0
  %v491 = vadd.f32 %v118, %v490
  %v492 = vpop.f32.mrb[0].mxu0
  %493 = vmatprep.mubr.bf16.mxu0 0
  %494 = vmatmul.mubr.bf16.gmra.mrb[0].mxu0 %v212
  %v495 = vpop.f32.mrb[0].mxu0
  %v496 = vadd.f32 %v118, %v495
  %v497 = vpop.f32.mrb[0].mxu0
  %v498 = vpop.f32.mrb[0].mxu0
  %v499 = vadd.f32 %v118, %v498
  %v500 = vpop.f32.mrb[0].mxu0
  %501 = vmatprep.mubr.bf16.mxu0 0
  %502 = vmatmul.mubr.bf16.gmra.mrb[0].mxu0 %v215
  %v503 = vpop.f32.mrb[0].mxu0
  %v504 = vadd.f32 %v118, %v503
  %v505 = vpop.f32.mrb[0].mxu0
  %v506 = vpop.f32.mrb[0].mxu0
  %v507 = vadd.f32 %v118, %v506
  %v508 = vpop.f32.mrb[0].mxu0
  %509 = vdwg.mxu0
  %vm510 = vcmask 261120
  %511 = vst.msk [vmem:[%s3] sm:$0xff] %vm510, %v256
  %512 = vst.msk [vmem:[%s3 + $0x8] sm:$0xff] %vm510, %v259
  %513 = vst.msk [vmem:[%s3 + $0x10] sm:$0xff] %vm510, %v264
  %514 = vst.msk [vmem:[%s3 + $0x18] sm:$0xff] %vm510, %v267
  %515 = vst.msk [vmem:[%s3 + $0x20] sm:$0xff] %vm510, %v272
  %516 = vst.msk [vmem:[%s3 + $0x28] sm:$0xff] %vm510, %v275
  %517 = vst.msk [vmem:[%s3 + $0x30] sm:$0xff] %vm510, %v280
  %518 = vst.msk [vmem:[%s3 + $0x38] sm:$0xff] %vm510, %v283
  %519 = vst.msk [vmem:[%s3 + $0x40] sm:$0xff] %vm510, %v288
  %520 = vst.msk [vmem:[%s3 + $0x48] sm:$0xff] %vm510, %v291
  %521 = vst.msk [vmem:[%s3 + $0x50] sm:$0xff] %vm510, %v296
  %522 = vst.msk [vmem:[%s3 + $0x58] sm:$0xff] %vm510, %v299
  %523 = vst.msk [vmem:[%s3 + $0x60] sm:$0xff] %vm510, %v304
  %524 = vst.msk [vmem:[%s3 + $0x68] sm:$0xff] %vm510, %v307
  %525 = vst.msk [vmem:[%s3 + $0x70] sm:$0xff] %vm510, %v312
  %526 = vst.msk [vmem:[%s3 + $0x78] sm:$0xff] %vm510, %v315
  %527 = vst.msk [vmem:[%s3 + $0x80] sm:$0xff] %vm510, %v320
  %528 = vst.msk [vmem:[%s3 + $0x88] sm:$0xff] %vm510, %v323
  %529 = vst.msk [vmem:[%s3 + $0x90] sm:$0xff] %vm510, %v328
  %530 = vst.msk [vmem:[%s3 + $0x98] sm:$0xff] %vm510, %v331
  %531 = vst.msk [vmem:[%s3 + $0xa0] sm:$0xff] %vm510, %v336
  %532 = vst.msk [vmem:[%s3 + $0xa8] sm:$0xff] %vm510, %v339
  %533 = vst.msk [vmem:[%s3 + $0xb0] sm:$0xff] %vm510, %v344
  %534 = vst.msk [vmem:[%s3 + $0xb8] sm:$0xff] %vm510, %v347
  %535 = vst.msk [vmem:[%s3 + $0xc0] sm:$0xff] %vm510, %v352
  %536 = vst.msk [vmem:[%s3 + $0xc8] sm:$0xff] %vm510, %v355
  %537 = vst.msk [vmem:[%s3 + $0xd0] sm:$0xff] %vm510, %v360
  %538 = vst.msk [vmem:[%s3 + $0xd8] sm:$0xff] %vm510, %v363
  %539 = vst.msk [vmem:[%s3 + $0xe0] sm:$0xff] %vm510, %v368
  %540 = vst.msk [vmem:[%s3 + $0xe8] sm:$0xff] %vm510, %v371
  %541 = vst.msk [vmem:[%s3 + $0xf0] sm:$0xff] %vm510, %v376
  %542 = vst.msk [vmem:[%s3 + $0xf8] sm:$0xff] %vm510, %v379
  %543 = vst.msk [vmem:[%s3 + $0x100] sm:$0xff] %vm510, %v384
  %544 = vst.msk [vmem:[%s3 + $0x108] sm:$0xff] %vm510, %v387
  %545 = vst.msk [vmem:[%s3 + $0x110] sm:$0xff] %vm510, %v392
  %546 = vst.msk [vmem:[%s3 + $0x118] sm:$0xff] %vm510, %v395
  %547 = vst.msk [vmem:[%s3 + $0x120] sm:$0xff] %vm510, %v400
  %548 = vst.msk [vmem:[%s3 + $0x128] sm:$0xff] %vm510, %v403
  %549 = vst.msk [vmem:[%s3 + $0x130] sm:$0xff] %vm510, %v408
  %550 = vst.msk [vmem:[%s3 + $0x138] sm:$0xff] %vm510, %v411
  %551 = vst.msk [vmem:[%s3 + $0x140] sm:$0xff] %vm510, %v416
  %552 = vst.msk [vmem:[%s3 + $0x148] sm:$0xff] %vm510, %v419
  %553 = vst.msk [vmem:[%s3 + $0x150] sm:$0xff] %vm510, %v424
  %554 = vst.msk [vmem:[%s3 + $0x158] sm:$0xff] %vm510, %v427
  %555 = vst.msk [vmem:[%s3 + $0x160] sm:$0xff] %vm510, %v432
  %556 = vst.msk [vmem:[%s3 + $0x168] sm:$0xff] %vm510, %v435
  %557 = vst.msk [vmem:[%s3 + $0x170] sm:$0xff] %vm510, %v440
  %558 = vst.msk [vmem:[%s3 + $0x178] sm:$0xff] %vm510, %v443
  %559 = vst.msk [vmem:[%s3 + $0x180] sm:$0xff] %vm510, %v448
  %560 = vst.msk [vmem:[%s3 + $0x188] sm:$0xff] %vm510, %v451
  %561 = vst.msk [vmem:[%s3 + $0x190] sm:$0xff] %vm510, %v456
  %562 = vst.msk [vmem:[%s3 + $0x198] sm:$0xff] %vm510, %v459
  %563 = vst.msk [vmem:[%s3 + $0x1a0] sm:$0xff] %vm510, %v464
  %564 = vst.msk [vmem:[%s3 + $0x1a8] sm:$0xff] %vm510, %v467
  %565 = vst.msk [vmem:[%s3 + $0x1b0] sm:$0xff] %vm510, %v472
  %566 = vst.msk [vmem:[%s3 + $0x1b8] sm:$0xff] %vm510, %v475
  %567 = vst.msk [vmem:[%s3 + $0x1c0] sm:$0xff] %vm510, %v480
  %568 = vst.msk [vmem:[%s3 + $0x1c8] sm:$0xff] %vm510, %v483
  %569 = vst.msk [vmem:[%s3 + $0x1d0] sm:$0xff] %vm510, %v488
  %570 = vst.msk [vmem:[%s3 + $0x1d8] sm:$0xff] %vm510, %v491
  %571 = vst.msk [vmem:[%s3 + $0x1e0] sm:$0xff] %vm510, %v496
  %572 = vst.msk [vmem:[%s3 + $0x1e8] sm:$0xff] %vm510, %v499
  %573 = vst.msk [vmem:[%s3 + $0x1f0] sm:$0xff] %vm510, %v504
  %574 = vst.msk [vmem:[%s3 + $0x1f8] sm:$0xff] %vm510, %v507
  // Predicated region
  $region14: #{tpu_custom_call.1} parent=0 // pred_check
    _
  $region15: #{tpu_custom_call.1} parent=0 // pred_check_branch
    %576 = sbr.rel (0) target = $region17
  $region16: #{tpu_custom_call.1} parent=0 // pred_region
    _
  $region17: #{tpu_custom_call.1} parent=0 // pred_fallthru
    _
  // Predicated region
  $region18: #{tpu_custom_call.1} parent=0 // pred_check
    _
  $region19: #{tpu_custom_call.1} parent=0 // pred_check_branch
    %578 = sbr.rel (0) target = $region21
  $region20: #{tpu_custom_call.1} parent=0 // pred_region
    _
  $region21: #{tpu_custom_call.1} parent=0 // pred_fallthru
    _

</llo_original>
